<compile_context>
chip_gen: v6e
topology: v6e:2x2x1
jax: 0.10.0
libtpu: 0.0.40
codegen_flags: <defaults>
</compile_context>

<pallas_src>
import functools

import jax
import jax.numpy as jnp
from jax import lax
from jax.experimental import pallas as pl
from jax.experimental.pallas import tpu as pltpu


# ---------------------------------------------------------------------------
# VMEM budget / tiling plan
# ---------------------------------------------------------------------------
def _vmem_budget_bytes():
    """Per-generation VMEM budget with ~25% headroom; v7x-safe fallback."""
    cap = 64 * 1024 * 1024
    try:
        cap = pltpu.get_tpu_info().vmem_capacity_bytes
    except Exception:
        pass
    return int(cap) * 3 // 4


def _plan_row_tile(s_pad, n_hidden, op_bytes, budget):
    """Largest row tile (multiple of 128, divides s_pad) whose working set fits."""
    fixed = (
        2 * s_pad * n_hidden * op_bytes      # resident x block (double-buffered)
        + s_pad * n_hidden * op_bytes        # K-projection VMEM scratch
        + 2 * 2 * n_hidden * n_hidden * op_bytes   # Wq + Wk (double-buffered)
        + 2 * 2 * n_hidden * 4               # biases (f32, double-buffered)
    )
    for tq in (1024, 512, 256, 128):
        if tq > s_pad or s_pad % tq:
            continue
        working = (
            2 * tq * s_pad * 4               # output row block (f32, double-buffered)
            + tq * n_hidden * 4              # q f32 intermediate
            + tq * s_pad * 4                 # attention tile before store
        )
        if fixed + working <= budget:
            return tq
    return None


# ---------------------------------------------------------------------------
# Fused kernel: per grid step (b, i)
#   - at i == 0: project K for the whole batch into VMEM scratch (once per batch)
#   - project the q row tile, then emit one (tq, S_pad) output row block
# ---------------------------------------------------------------------------
def _fused_attention_matrix_kernel(x_ref, wq_ref, bq_ref, wk_ref, bk_ref,
                                   o_ref, kproj_ref, *, tq):
    # x_ref:     (S_pad, H)  all rows of batch b (resident across the i axis)
    # wq/wk_ref: (H, H)      PyTorch (out, in) layout
    # bq/bk_ref: (1, H)      f32 (added after f32 accumulation)
    # o_ref:     (tq, S_pad) f32 output row block
    # kproj_ref: (S_pad, H)  VMEM scratch, K = x @ Wk^T + bk for batch b
    i = pl.program_id(1)

    @pl.when(i == 0)
    def _():
        k = lax.dot_general(
            x_ref[...], wk_ref[...],
            dimension_numbers=(((1,), (1,)), ((), ())),   # contract H, no transpose
            preferred_element_type=jnp.float32,
        ) + bk_ref[...]
        kproj_ref[...] = k.astype(kproj_ref.dtype)

    start = pl.multiple_of(i * tq, tq)
    xq = x_ref[pl.ds(start, tq), :]                       # (tq, H) q-row slice
    q = lax.dot_general(
        xq, wq_ref[...],
        dimension_numbers=(((1,), (1,)), ((), ())),       # contract H, no transpose
        preferred_element_type=jnp.float32,
    ) + bq_ref[...]

    o_ref[...] = lax.dot_general(
        q.astype(kproj_ref.dtype), kproj_ref[...],
        dimension_numbers=(((1,), (1,)), ((), ())),       # 'qh,kh->qk', K never transposed
        preferred_element_type=jnp.float32,
    ).astype(o_ref.dtype)


# ---------------------------------------------------------------------------
# XLA fallback for shapes whose resident-K working set cannot fit VMEM.
# ---------------------------------------------------------------------------
def _attention_matrix_xla(x, wq, bq, wk, bk):
    q = jnp.einsum("bsh,oh->bso", x, wq) + bq
    k = jnp.einsum("bsh,oh->bso", x, wk) + bk
    return jnp.einsum("bsh,bth->bst", q, k).astype(jnp.float32)


def attention_matrix(embedding, wq, bq, wk, bk, *, compute_dtype=None):
    """Forward pass of AttentionMatrix.

    embedding: (B, S, H); wq/wk: (H, H) PyTorch (out, in) layout; bq/bk: (H,).
    compute_dtype: None -> keep input dtype; jnp.bfloat16 -> bf16 MXU operands with
    f32 accumulation (Q/K are doubly-rounded through bf16 by design; looser tol).
    Returns (B, S, S) float32, equal to q @ k.transpose(2, 1).
    """
    B, S, H = embedding.shape
    op_dtype = embedding.dtype if compute_dtype is None else compute_dtype
    op_bytes = jnp.dtype(op_dtype).itemsize

    s_pad = ((S + 127) // 128) * 128        # lane-dense output / unmasked stores
    budget = _vmem_budget_bytes()
    tq = _plan_row_tile(s_pad, H, op_bytes, budget)
    if tq is None:
        # TODO(synk): tiled streaming-K Pallas path for very large S*H.
        return _attention_matrix_xla(embedding.astype(op_dtype),
                                     wq.astype(op_dtype), bq.astype(jnp.float32),
                                     wk.astype(op_dtype), bk.astype(jnp.float32))

    x = embedding.astype(op_dtype)
    if s_pad != S:
        x = jnp.pad(x, ((0, 0), (0, s_pad - S), (0, 0)))
    wq_ = wq.astype(op_dtype)
    wk_ = wk.astype(op_dtype)
    bq_ = bq.reshape(1, H).astype(jnp.float32)
    bk_ = bk.reshape(1, H).astype(jnp.float32)

    kernel = functools.partial(_fused_attention_matrix_kernel, tq=tq)

    out = pl.pallas_call(
        kernel,
        out_shape=jax.ShapeDtypeStruct((B, s_pad, s_pad), jnp.float32),
        grid=(B, s_pad // tq),
        in_specs=[
            # Full x for batch b, resident across the row-block axis (fetched once/batch).
            pl.BlockSpec((None, s_pad, H), lambda b, i: (b, 0, 0)),
            pl.BlockSpec((H, H), lambda b, i: (0, 0)),     # Wq (resident)
            pl.BlockSpec((1, H), lambda b, i: (0, 0)),     # bq
            pl.BlockSpec((H, H), lambda b, i: (0, 0)),     # Wk (resident)
            pl.BlockSpec((1, H), lambda b, i: (0, 0)),     # bk
        ],
        out_specs=pl.BlockSpec((None, tq, s_pad), lambda b, i: (b, i, 0)),
        scratch_shapes=[pltpu.VMEM((s_pad, H), op_dtype)],  # K projection (per batch)
        compiler_params=pltpu.CompilerParams(
            # i carries the K-scratch dependency -> "arbitrary"; batch is "parallel".
            dimension_semantics=("parallel", "arbitrary"),
            vmem_limit_bytes=budget,
        ),
    )(x, wq_, bq_, wk_, bk_)

    if s_pad != S:
        out = out[:, :S, :S]
    return out


if __name__ == "__main__":
    def ref_attention(x, wq, bq, wk, bk):
        q = jnp.einsum("bsh,oh->bso", x, wq) + bq
        k = jnp.einsum("bsh,oh->bso", x, wk) + bk
        return jnp.einsum("bsh,bth->bst", q, k)

    key = jax.random.PRNGKey(0)

    # --- Case 1: module-sized tiny shapes (S=8 -> padded to 128 inside) -----
    B, S, H = 2, 8, 32
    k_x, k_wq, k_bq, k_wk, k_bk = jax.random.split(key, 5)
    x = jax.random.normal(k_x, (B, S, H), dtype=jnp.float32)
    # PyTorch nn.Linear weight layout: (out_features, in_features)
    wq = jax.random.normal(k_wq, (H, H), dtype=jnp.float32) * 0.1
    bq = jax.random.normal(k_bq, (H,), dtype=jnp.float32) * 0.1
    wk = jax.random.normal(k_wk, (H, H), dtype=jnp.float32) * 0.1
    bk = jax.random.normal(k_bk, (H,), dtype=jnp.float32) * 0.1

    out = jax.block_until_ready(attention_matrix(x, wq, bq, wk, bk))
    ref = ref_attention(x, wq, bq, wk, bk)
    assert out.shape == (B, S, S)
    assert jnp.allclose(out, ref, atol=1e-3, rtol=1e-3)

    # --- Case 2: 128-aligned shapes (no padding, multi-row-block grid) ------
    B2, S2, H2 = 2, 256, 128
    k_x2, k_wq2, k_bq2, k_wk2, k_bk2 = jax.random.split(jax.random.PRNGKey(1), 5)
    x2 = jax.random.normal(k_x2, (B2, S2, H2), dtype=jnp.float32)
    wq2 = jax.random.normal(k_wq2, (H2, H2), dtype=jnp.float32) * 0.1
    bq2 = jax.random.normal(k_bq2, (H2,), dtype=jnp.float32) * 0.1
    wk2 = jax.random.normal(k_wk2, (H2, H2), dtype=jnp.float32) * 0.1
    bk2 = jax.random.normal(k_bk2, (H2,), dtype=jnp.float32) * 0.1

    out2 = jax.block_until_ready(attention_matrix(x2, wq2, bq2, wk2, bk2))
    ref2 = ref_attention(x2, wq2, bq2, wk2, bk2)
    assert out2.shape == (B2, S2, S2)
    assert jnp.allclose(out2, ref2, atol=2e-1, rtol=2e-2)

    # --- Case 3: bf16 operands / f32 accumulation (looser tolerance) --------
    out_bf16 = jax.block_until_ready(
        attention_matrix(x2, wq2, bq2, wk2, bk2, compute_dtype=jnp.bfloat16))
    assert out_bf16.shape == (B2, S2, S2)
    assert jnp.allclose(out_bf16, ref2, atol=1.0, rtol=0.05)

    print("KERNEL_OK")
</pallas_src>

<mosaic_0001>
module attributes {stable_mosaic.version = 11 : i64} {
  func.func @_fused_attention_matrix_kernel(%arg0: i32, %arg1: i32, %arg2: memref<1x128x32xf32, #tpu.memory_space<vmem>>, %arg3: memref<32x32xf32, #tpu.memory_space<vmem>>, %arg4: memref<1x32xf32, #tpu.memory_space<vmem>>, %arg5: memref<32x32xf32, #tpu.memory_space<vmem>>, %arg6: memref<1x32xf32, #tpu.memory_space<vmem>>, %arg7: memref<1x128x128xf32, #tpu.memory_space<vmem>>, %arg8: memref<128x32xf32, #tpu.memory_space<vmem>>) attributes {dimension_semantics = [#tpu.dimension_semantics<parallel>, #tpu.dimension_semantics<arbitrary>], iteration_bounds = array<i64: 2, 1>, scalar_prefetch = 0 : i64, scratch_operands = 1 : i64, tpu.core_type = #tpu.core_type<tc>, window_params = [{transform_indices = @transform_0, window_bounds = array<i64: 1, 128, 32>}, {pipeline_mode = #tpu.pipeline_mode<synchronous>, transform_indices = @transform_1, window_bounds = array<i64: 32, 32>}, {pipeline_mode = #tpu.pipeline_mode<synchronous>, transform_indices = @transform_2, window_bounds = array<i64: 1, 32>}, {pipeline_mode = #tpu.pipeline_mode<synchronous>, transform_indices = @transform_3, window_bounds = array<i64: 32, 32>}, {pipeline_mode = #tpu.pipeline_mode<synchronous>, transform_indices = @transform_4, window_bounds = array<i64: 1, 32>}, {transform_indices = @transform_5, window_bounds = array<i64: 1, 128, 128>}]} {
    %c0_i32 = arith.constant 0 : i32
    %0 = arith.cmpi eq, %arg1, %c0_i32 : i32
    %1 = arith.extui %0 : i1 to i32
    %c0_i32_0 = arith.constant 0 : i32
    %2 = arith.cmpi ne, %1, %c0_i32_0 : i32
    scf.if %2 {
      %c0_12 = arith.constant 0 : index
      %c0_13 = arith.constant 0 : index
      %c0_14 = arith.constant 0 : index
      %18 = vector.load %arg2[%c0_12, %c0_13, %c0_14] : memref<1x128x32xf32, #tpu.memory_space<vmem>>, vector<1x128x32xf32>
      %19 = vector.shape_cast %18 : vector<1x128x32xf32> to vector<128x32xf32>
      %c0_15 = arith.constant 0 : index
      %c0_16 = arith.constant 0 : index
      %20 = vector.load %arg5[%c0_15, %c0_16] : memref<32x32xf32, #tpu.memory_space<vmem>>, vector<32x32xf32>
      %cst_17 = arith.constant dense<0.000000e+00> : vector<128x32xf32>
      %21 = tpu.matmul %19, %20, %cst_17 {dimension_numbers = #tpu.dot_dimension_numbers<[1], [1], [0], [0], [0, 0, 1, 0], [], []>} : vector<128x32xf32>, vector<32x32xf32>, vector<128x32xf32> -> vector<128x32xf32>
      %c0_18 = arith.constant 0 : index
      %c0_19 = arith.constant 0 : index
      %22 = vector.load %arg6[%c0_18, %c0_19] : memref<1x32xf32, #tpu.memory_space<vmem>>, vector<1x32xf32>
      %23 = vector.broadcast %22 : vector<1x32xf32> to vector<128x32xf32>
      %24 = arith.addf %21, %23 : vector<128x32xf32>
      %c0_20 = arith.constant 0 : index
      %c0_21 = arith.constant 0 : index
      %25 = vector.load %arg8[%c0_20, %c0_21] : memref<128x32xf32, #tpu.memory_space<vmem>>, vector<128x32xf32>
      tpu.vector_store %arg8[%c0_20, %c0_21], %24 {strides = array<i32>} : memref<128x32xf32, #tpu.memory_space<vmem>>, vector<128x32xf32>,
    } else {
    }
    %c128_i32 = arith.constant 128 : i32
    %3 = arith.muli %arg1, %c128_i32 : i32
    %4 = tpu.assume_multiple %3, 128 : i32
    %c0 = arith.constant 0 : index
    %5 = arith.index_cast %4 : i32 to index
    %c0_1 = arith.constant 0 : index
    %6 = vector.load %arg2[%c0, %5, %c0_1] : memref<1x128x32xf32, #tpu.memory_space<vmem>>, vector<1x128x32xf32>
    %7 = vector.shape_cast %6 : vector<1x128x32xf32> to vector<128x32xf32>
    %c0_2 = arith.constant 0 : index
    %c0_3 = arith.constant 0 : index
    %8 = vector.load %arg3[%c0_2, %c0_3] : memref<32x32xf32, #tpu.memory_space<vmem>>, vector<32x32xf32>
    %cst = arith.constant dense<0.000000e+00> : vector<128x32xf32>
    %9 = tpu.matmul %7, %8, %cst {dimension_numbers = #tpu.dot_dimension_numbers<[1], [1], [0], [0], [0, 0, 1, 0], [], []>} : vector<128x32xf32>, vector<32x32xf32>, vector<128x32xf32> -> vector<128x32xf32>
    %c0_4 = arith.constant 0 : index
    %c0_5 = arith.constant 0 : index
    %10 = vector.load %arg4[%c0_4, %c0_5] : memref<1x32xf32, #tpu.memory_space<vmem>>, vector<1x32xf32>
    %11 = vector.broadcast %10 : vector<1x32xf32> to vector<128x32xf32>
    %12 = arith.addf %9, %11 : vector<128x32xf32>
    %c0_6 = arith.constant 0 : index
    %c0_7 = arith.constant 0 : index
    %13 = vector.load %arg8[%c0_6, %c0_7] : memref<128x32xf32, #tpu.memory_space<vmem>>, vector<128x32xf32>
    %cst_8 = arith.constant dense<0.000000e+00> : vector<128x128xf32>
    %14 = tpu.matmul %12, %13, %cst_8 {dimension_numbers = #tpu.dot_dimension_numbers<[1], [1], [0], [0], [0, 0, 1, 0], [], []>} : vector<128x32xf32>, vector<128x32xf32>, vector<128x128xf32> -> vector<128x128xf32>
    %c0_9 = arith.constant 0 : index
    %c0_10 = arith.constant 0 : index
    %c0_11 = arith.constant 0 : index
    %15 = vector.load %arg7[%c0_9, %c0_10, %c0_11] : memref<1x128x128xf32, #tpu.memory_space<vmem>>, vector<1x128x128xf32>
    %16 = vector.shape_cast %15 : vector<1x128x128xf32> to vector<128x128xf32>
    %17 = vector.shape_cast %14 : vector<128x128xf32> to vector<1x128x128xf32>
    tpu.vector_store %arg7[%c0_9, %c0_10, %c0_11], %17 {strides = array<i32>} : memref<1x128x128xf32, #tpu.memory_space<vmem>>, vector<1x128x128xf32>,
    return
  }
  func.func @transform_0(%arg0: i32, %arg1: i32) -> (i32, i32, i32) {
    %c0_i32 = arith.constant 0 : i32
    %c0_i32_0 = arith.constant 0 : i32
    %c0_i32_1 = arith.constant 0 : i32
    return %arg0, %c0_i32, %c0_i32_0 : i32, i32, i32
  }
  func.func @transform_1(%arg0: i32, %arg1: i32) -> (i32, i32) {
    %c0_i32 = arith.constant 0 : i32
    %c0_i32_0 = arith.constant 0 : i32
    %c0_i32_1 = arith.constant 0 : i32
    return %c0_i32, %c0_i32_0 : i32, i32
  }
  func.func @transform_2(%arg0: i32, %arg1: i32) -> (i32, i32) {
    %c0_i32 = arith.constant 0 : i32
    %c0_i32_0 = arith.constant 0 : i32
    %c0_i32_1 = arith.constant 0 : i32
    return %c0_i32, %c0_i32_0 : i32, i32
  }
  func.func @transform_3(%arg0: i32, %arg1: i32) -> (i32, i32) {
    %c0_i32 = arith.constant 0 : i32
    %c0_i32_0 = arith.constant 0 : i32
    %c0_i32_1 = arith.constant 0 : i32
    return %c0_i32, %c0_i32_0 : i32, i32
  }
  func.func @transform_4(%arg0: i32, %arg1: i32) -> (i32, i32) {
    %c0_i32 = arith.constant 0 : i32
    %c0_i32_0 = arith.constant 0 : i32
    %c0_i32_1 = arith.constant 0 : i32
    return %c0_i32, %c0_i32_0 : i32, i32
  }
  func.func @transform_5(%arg0: i32, %arg1: i32) -> (i32, i32, i32) {
    %c0_i32 = arith.constant 0 : i32
    %c0_i32_0 = arith.constant 0 : i32
    return %arg0, %arg1, %c0_i32 : i32, i32, i32
  }
}

</mosaic_0001>

<llo_original>
// kernel: tpu_custom_call.1
$region0: #{tpu_custom_call.1}
  #allocation0 [shape = 'u32[]', space=smem, size = 0x4, offset = 0x4, fixed_abs, tag = 'smem constant byte address 0x4 - core index']
  #allocation1 [shape = 'u32[144,128]{1,0:T(1,128)}', space=vmem, size = 0x12000, scoped, tag = 'internal scratch']
  #allocation2 [shape = 'f32[128,32]{1,0:T(8,128)}', space=vmem, size = 0x10000, scoped, tag = 'scratch operand']
  %s0 = inlined_call_operand.vmem [shape: f32[2,128,32], index: 0, kind: input, shape index: {}]
  %s1 = inlined_call_operand.vmem [shape: f32[32,32], index: 1, kind: input, shape index: {}]
  %s2 = inlined_call_operand.vmem [shape: f32[1,32], index: 2, kind: input, shape index: {}]
  %s3 = inlined_call_operand.vmem [shape: f32[32,32], index: 3, kind: input, shape index: {}]
  %s4 = inlined_call_operand.vmem [shape: f32[1,32], index: 4, kind: input, shape index: {}]
  %s5 = inlined_call_operand.hbm [shape: f32[2,128,128], index: 5, kind: output, shape index: {}]
  %s6 = sld [smem:[#allocation0]]
  $region57: #{tpu_custom_call.1} parent=0
    _
  %s8 = ssub.s32 1, %s6
  %s9 = scalar_select 0, %s8, %s6
  $region1: #{tpu_custom_call.1} parent=0
    #allocation3 [shape = 'u8[131072]{0}', space=vmem, size = 0x20000, scoped, tag = 'output window, operand 0']
    #allocation4 [shape = 's32[2]{0}', space=sflag, size = 0x8, scoped, tag = 'scoped memory for tpu_custom_call.1']
    %10 = vsyncpa [#allocation4], 0
    %s11 = scalar_lea.sflag [#allocation4], 1
    %12 = vsyncpa %s11, 0
    loop: start=0, step=1, limit=4
    $region2: #{tpu_custom_call.1} parent=1 // loop_pre_header
      _
    $region3: #{tpu_custom_call.1} parent=1 // loop_header
      %s14 = sphi 0, %s18
      %p15 = scmp.ge.s32.totalorder %s14, 4
      %s21 = sphi 0, %s33
      %s22 = sphi 0, %s29
      %s23 = sphi 0, %s21
      %s24 = sphi 0, %s22
      %s25 = sphi 0, %s23
      %s26 = sphi 0, %s24
      %s36 = sphi 0, %s38
      %s39 = sphi 0, %s36
      %s40 = sphi 0, %s39
      %s56 = sphi 0, %s40
      %s60 = sphi 0, %s60
      %s62 = sphi 0, %s60
      %s63 = sphi 0, %s62
      %s77 = sphi 0, %s63
      %s81 = sphi 0, %s81
      %s83 = sphi 0, %s81
      %s84 = sphi 0, %s83
      %s98 = sphi 0, %s84
      %s102 = sphi 0, %s102
      %s104 = sphi 0, %s102
      %s105 = sphi 0, %s104
      %s119 = sphi 0, %s105
      %s123 = sphi 0, %s123
      %s125 = sphi 0, %s123
      %s126 = sphi 0, %s125
      %s140 = sphi 0, %s126
      %s148 = sphi 0, %s150
      %s151 = sphi 0, %s148
      %s152 = sphi 0, %s151
      %s168 = sphi 0, %s152
    $region4: #{tpu_custom_call.1} parent=1 // loop_header_branch
      %17 = sbr.rel (%p15) target = $region8
    $region5: #{tpu_custom_call.1} parent=1 // loop_body
      %s19 = ssub.s32 %s14, 1
      %s20 = ssub.s32 %s14, 2
      %s27 = sadd.s32 1, %s22
      %p28 = scmp.ge.s32.totalorder %s27, 1
      %s29 = scalar_select %p28, 0, %s27
      %s30 = sadd.s32 1, %s21
      %s31 = scalar_select %p28, %s30, %s21
      %p32 = scmp.ge.s32.totalorder %s31, 2
      %s33 = scalar_select %p32, 0, %s31
      %s34 = ssub.s32 %s21, %s33
      %p35 = scmp.eq.s32.totalorder %s34, 0
      %s37 = sadd.s32 %s36, 1
      %s38 = scalar_select %p35, %s36, %s37
      %p41 = pneg %p35
      %p42 = scmp.eq.s32.totalorder %s14, 1
      %p43 = por %p41, %p42
      %p44 = scmp.ne.s32.totalorder %s36, %s39
      %p45 = scmp.eq.s32.totalorder %s14, 0
      %p46 = por %p44, %p45
      %p47 = scmp.ne.s32.totalorder %s36, %s39
      %p48 = scmp.eq.s32.totalorder %s19, 1
      %p49 = por %p47, %p48
      %p50 = scmp.ne.s32.totalorder %s39, %s40
      %p51 = scmp.eq.s32.totalorder %s19, 0
      %p52 = por %p50, %p51
      %p53 = scmp.ne.s32.totalorder %s39, %s40
      %p54 = scmp.eq.s32.totalorder %s20, 1
      %p55 = por %p53, %p54
      %p57 = scmp.ne.s32.totalorder %s40, %s56
      %p58 = scmp.eq.s32.totalorder %s20, 0
      %p59 = por %p57, %p58
      %s61 = sadd.s32 %s60, 1
      %p64 = scmp.eq.s32.totalorder %s14, 1
      %p65 = scmp.ne.s32.totalorder %s60, %s62
      %p66 = scmp.eq.s32.totalorder %s14, 0
      %p67 = por %p65, %p66
      %p68 = scmp.ne.s32.totalorder %s60, %s62
      %p69 = scmp.eq.s32.totalorder %s19, 1
      %p70 = por %p68, %p69
      %p71 = scmp.ne.s32.totalorder %s62, %s63
      %p72 = scmp.eq.s32.totalorder %s19, 0
      %p73 = por %p71, %p72
      %p74 = scmp.ne.s32.totalorder %s62, %s63
      %p75 = scmp.eq.s32.totalorder %s20, 1
      %p76 = por %p74, %p75
      %p78 = scmp.ne.s32.totalorder %s63, %s77
      %p79 = scmp.eq.s32.totalorder %s20, 0
      %p80 = por %p78, %p79
      %s82 = sadd.s32 %s81, 1
      %p85 = scmp.eq.s32.totalorder %s14, 1
      %p86 = scmp.ne.s32.totalorder %s81, %s83
      %p87 = scmp.eq.s32.totalorder %s14, 0
      %p88 = por %p86, %p87
      %p89 = scmp.ne.s32.totalorder %s81, %s83
      %p90 = scmp.eq.s32.totalorder %s19, 1
      %p91 = por %p89, %p90
      %p92 = scmp.ne.s32.totalorder %s83, %s84
      %p93 = scmp.eq.s32.totalorder %s19, 0
      %p94 = por %p92, %p93
      %p95 = scmp.ne.s32.totalorder %s83, %s84
      %p96 = scmp.eq.s32.totalorder %s20, 1
      %p97 = por %p95, %p96
      %p99 = scmp.ne.s32.totalorder %s84, %s98
      %p100 = scmp.eq.s32.totalorder %s20, 0
      %p101 = por %p99, %p100
      %s103 = sadd.s32 %s102, 1
      %p106 = scmp.eq.s32.totalorder %s14, 1
      %p107 = scmp.ne.s32.totalorder %s102, %s104
      %p108 = scmp.eq.s32.totalorder %s14, 0
      %p109 = por %p107, %p108
      %p110 = scmp.ne.s32.totalorder %s102, %s104
      %p111 = scmp.eq.s32.totalorder %s19, 1
      %p112 = por %p110, %p111
      %p113 = scmp.ne.s32.totalorder %s104, %s105
      %p114 = scmp.eq.s32.totalorder %s19, 0
      %p115 = por %p113, %p114
      %p116 = scmp.ne.s32.totalorder %s104, %s105
      %p117 = scmp.eq.s32.totalorder %s20, 1
      %p118 = por %p116, %p117
      %p120 = scmp.ne.s32.totalorder %s105, %s119
      %p121 = scmp.eq.s32.totalorder %s20, 0
      %p122 = por %p120, %p121
      %s124 = sadd.s32 %s123, 1
      %p127 = scmp.eq.s32.totalorder %s14, 1
      %p128 = scmp.ne.s32.totalorder %s123, %s125
      %p129 = scmp.eq.s32.totalorder %s14, 0
      %p130 = por %p128, %p129
      %p131 = scmp.ne.s32.totalorder %s123, %s125
      %p132 = scmp.eq.s32.totalorder %s19, 1
      %p133 = por %p131, %p132
      %p134 = scmp.ne.s32.totalorder %s125, %s126
      %p135 = scmp.eq.s32.totalorder %s19, 0
      %p136 = por %p134, %p135
      %p137 = scmp.ne.s32.totalorder %s125, %s126
      %p138 = scmp.eq.s32.totalorder %s20, 1
      %p139 = por %p137, %p138
      %p141 = scmp.ne.s32.totalorder %s126, %s140
      %p142 = scmp.eq.s32.totalorder %s20, 0
      %p143 = por %p141, %p142
      %s144 = ssub.s32 %s21, %s33
      %s145 = ssub.s32 %s22, %s29
      %s146 = sor.u32 %s144, %s145
      %p147 = scmp.eq.s32.totalorder %s146, 0
      %s149 = sadd.s32 %s148, 1
      %s150 = scalar_select %p147, %s148, %s149
      %p153 = pneg %p147
      %p154 = scmp.eq.s32.totalorder %s14, 1
      %p155 = por %p153, %p154
      %p156 = scmp.ne.s32.totalorder %s148, %s151
      %p157 = scmp.eq.s32.totalorder %s14, 0
      %p158 = por %p156, %p157
      %p159 = scmp.ne.s32.totalorder %s148, %s151
      %p160 = scmp.eq.s32.totalorder %s19, 1
      %p161 = por %p159, %p160
      %p162 = scmp.ne.s32.totalorder %s151, %s152
      %p163 = scmp.eq.s32.totalorder %s19, 0
      %p164 = por %p162, %p163
      %p165 = scmp.ne.s32.totalorder %s151, %s152
      %p166 = scmp.eq.s32.totalorder %s20, 1
      %p167 = por %p165, %p166
      %p169 = scmp.ne.s32.totalorder %s152, %s168
      %p170 = scmp.eq.s32.totalorder %s20, 0
      %p171 = por %p169, %p170
      %p172 = scmp.le.s32.totalorder 1, %s14
      %p173 = scmp.lt.s32.totalorder %s14, 3
      %p174 = pnand %p172, %p173
      %p175 = pneg %p174
      // Predicated region
      $region9: #{tpu_custom_call.1} parent=5 // pred_check
        _
      $region10: #{tpu_custom_call.1} parent=5 // pred_check_branch
        %177 = sbr.rel (%p174) target = $region12
      $region11: #{tpu_custom_call.1} parent=5 // pred_region
        %s178 = ssub.s32 %s14, 1
        // Predicated region
        $region13: #{tpu_custom_call.1} parent=11 // pred_check
          %p179 = pneg %p73
        $region14: #{tpu_custom_call.1} parent=11 // pred_check_branch
          %181 = sbr.rel (%p179) target = $region16
        $region15: #{tpu_custom_call.1} parent=11 // pred_region
          _
        $region16: #{tpu_custom_call.1} parent=11 // pred_fallthru
          _
        // Predicated region
        $region17: #{tpu_custom_call.1} parent=11 // pred_check
          %p182 = pneg %p94
        $region18: #{tpu_custom_call.1} parent=11 // pred_check_branch
          %184 = sbr.rel (%p182) target = $region20
        $region19: #{tpu_custom_call.1} parent=11 // pred_region
          _
        $region20: #{tpu_custom_call.1} parent=11 // pred_fallthru
          _
        // Predicated region
        $region21: #{tpu_custom_call.1} parent=11 // pred_check
          %p185 = pneg %p115
        $region22: #{tpu_custom_call.1} parent=11 // pred_check_branch
          %187 = sbr.rel (%p185) target = $region24
        $region23: #{tpu_custom_call.1} parent=11 // pred_region
          _
        $region24: #{tpu_custom_call.1} parent=11 // pred_fallthru
          _
        // Predicated region
        $region25: #{tpu_custom_call.1} parent=11 // pred_check
          %p188 = pneg %p136
        $region26: #{tpu_custom_call.1} parent=11 // pred_check_branch
          %190 = sbr.rel (%p188) target = $region28
        $region27: #{tpu_custom_call.1} parent=11 // pred_region
          _
        $region28: #{tpu_custom_call.1} parent=11 // pred_fallthru
          _
      $region12: #{tpu_custom_call.1} parent=5 // pred_fallthru
        _
      %p191 = scmp.lt.s32.totalorder %s14, 2
      // Predicated region
      $region29: #{tpu_custom_call.1} parent=5 // pred_check
        %p192 = pneg %p191
      $region30: #{tpu_custom_call.1} parent=5 // pred_check_branch
        %194 = sbr.rel (%p192) target = $region32
      $region31: #{tpu_custom_call.1} parent=5 // pred_region
        // Predicated region
        $region33: #{tpu_custom_call.1} parent=31 // pred_check
          %p195 = pneg %p46
        $region34: #{tpu_custom_call.1} parent=31 // pred_check_branch
          %197 = sbr.rel (%p195) target = $region36
        $region35: #{tpu_custom_call.1} parent=31 // pred_region
          %p198 = scmp.lt.s32.totalorder %s21, 1
          %s199 = scalar_select %p198, %s21, 1
          %s200 = smul.addr %s199, 16
          %s201 = smul.addr %s200, 8
          %s202 = scalar_lea.vmem %s0, %s201
        $region36: #{tpu_custom_call.1} parent=31 // pred_fallthru
          _
      $region32: #{tpu_custom_call.1} parent=5 // pred_fallthru
        _
      %p203 = scmp.le.s32.totalorder 1, %s14
      %p204 = scmp.lt.s32.totalorder %s14, 3
      %p205 = pnand %p203, %p204
      %p206 = pneg %p205
      // Predicated region
      $region37: #{tpu_custom_call.1} parent=5 // pred_check
        _
      $region38: #{tpu_custom_call.1} parent=5 // pred_check_branch
        %208 = sbr.rel (%p205) target = $region40
      $region39: #{tpu_custom_call.1} parent=5 // pred_region
        %s209 = ssub.s32 %s14, 1
        %p210 = scmp.lt.s32.totalorder %s23, 1
        %s211 = scalar_select %p210, %s23, 1
        %s212 = smul.addr %s211, 16
        %s213 = smul.addr %s212, 8
        %s214 = scalar_lea.vmem %s0, %s213
        %p215 = pneg %p52
        %p216 = pneg %p49
        %p217 = pneg %p73
        %p218 = pneg %p70
        %p219 = pneg %p94
        %p220 = pneg %p91
        %p221 = pneg %p115
        %p222 = pneg %p112
        %p223 = pneg %p136
        %p224 = pneg %p133
        %p225 = pneg %p164
        %p226 = pneg %p161
        %s227 = sand.u32 %s151, 1
        %s228 = scalar_lea.sflag [#allocation4], %s227
        %s229 = sand.u32 %s151, 1
        %s230 = smul.addr %s229, 128
        %s231 = scalar_lea.vmem [#allocation3], %s230
        %p232 = scmp.lt.s32.totalorder %s23, 1
        %s233 = scalar_select %p232, %s23, 1
        %s234 = smul.addr %s233, 16
        %s235 = smul.addr %s234, 8
        %s236 = scalar_lea.vmem %s0, %s235
        %s237 = smul.u32 16, %s24
        %p238 = scmp.eq.s32.totalorder %s24, 0
        // Predicated region
        $region41: #{tpu_custom_call.1} parent=39 // pred_check
          %p239 = pneg %p238
        $region42: #{tpu_custom_call.1} parent=39 // pred_check_branch
          %241 = sbr.rel (%p239) target = $region44
        $region43: #{tpu_custom_call.1} parent=39 // pred_region
          %v242 = vld [vmem:[%s236] sm:$0xff]
          %v243 = vld [vmem:[%s236 + $0x8] sm:$0xff]
          %v244 = vld [vmem:[%s236 + $0x10] sm:$0xff]
          %v245 = vld [vmem:[%s236 + $0x18] sm:$0xff]
          %v246 = vld [vmem:[%s236 + $0x20] sm:$0xff]
          %v247 = vld [vmem:[%s236 + $0x28] sm:$0xff]
          %v248 = vld [vmem:[%s236 + $0x30] sm:$0xff]
          %v249 = vld [vmem:[%s236 + $0x38] sm:$0xff]
          %v250 = vld [vmem:[%s236 + $0x40] sm:$0xff]
          %v251 = vld [vmem:[%s236 + $0x48] sm:$0xff]
          %v252 = vld [vmem:[%s236 + $0x50] sm:$0xff]
          %v253 = vld [vmem:[%s236 + $0x58] sm:$0xff]
          %v254 = vld [vmem:[%s236 + $0x60] sm:$0xff]
          %v255 = vld [vmem:[%s236 + $0x68] sm:$0xff]
          %v256 = vld [vmem:[%s236 + $0x70] sm:$0xff]
          %v257 = vld [vmem:[%s236 + $0x78] sm:$0xff]
          %v258 = vld [vmem:[%s3] sm:$0xff]
          %v259 = vld [vmem:[%s3 + $0x8] sm:$0xff]
          %v260 = vld [vmem:[%s3 + $0x10] sm:$0xff]
          %v261 = vld [vmem:[%s3 + $0x18] sm:$0xff]
          %v262 = vld [vmem:[%s4] sm:$0x1]
          %v264 = vlaneseq
          %v265 = vshrl.u32 %v264, 7
          %v266 = vsub.s32 0, %v265
          %v267 = vrot.slane %v262, %v266
          %vm269 = vcmask 261120
          %v271 = vsel %vm269, %v242, 0
          %v274 = vsel %vm269, %v243, 0
          %v277 = vsel %vm269, %v244, 0
          %v280 = vsel %vm269, %v245, 0
          %v283 = vsel %vm269, %v246, 0
          %v286 = vsel %vm269, %v247, 0
          %v289 = vsel %vm269, %v248, 0
          %v292 = vsel %vm269, %v249, 0
          %v295 = vsel %vm269, %v250, 0
          %v298 = vsel %vm269, %v251, 0
          %v301 = vsel %vm269, %v252, 0
          %v304 = vsel %vm269, %v253, 0
          %v307 = vsel %vm269, %v254, 0
          %v310 = vsel %vm269, %v255, 0
          %v313 = vsel %vm269, %v256, 0
          %v316 = vsel %vm269, %v257, 0
          %v319 = vsel %vm269, %v258, 0
          %v322 = vsel %vm269, %v259, 0
          %v325 = vsel %vm269, %v260, 0
          %v328 = vsel %vm269, %v261, 0
          %330 = vmatprep.subr.mxu0 0.0
          %331 = vmatpush1.xpose.msra.mxu0 0.0
          %332 = vmatprep.subr.mxu0 0.0
          %333 = vmatpush1.xpose.msra.mxu0 0.0
          %334 = vmatprep.subr.mxu0 0.0
          %335 = vmatpush1.xpose.msra.mxu0 0.0
          %336 = vmatprep.subr.mxu0 0.0
          %337 = vmatpush1.xpose.msra.mxu0 0.0
          %338 = vmatprep.subr.mxu0 0.0
          %339 = vmatpush1.xpose.msra.mxu0 0.0
          %340 = vmatprep.subr.mxu0 0.0
          %341 = vmatpush1.xpose.msra.mxu0 0.0
          %342 = vmatprep.subr.mxu0 0.0
          %343 = vmatpush1.xpose.msra.mxu0 0.0
          %344 = vmatprep.subr.mxu0 0.0
          %345 = vmatpush1.xpose.msra.mxu0 0.0
          %346 = vmatprep.subr.mxu0 0.0
          %347 = vmatpush1.xpose.msra.mxu0 0.0
          %348 = vmatprep.subr.mxu0 0.0
          %349 = vmatpush1.xpose.msra.mxu0 0.0
          %350 = vmatprep.subr.mxu0 0.0
          %351 = vmatpush1.xpose.msra.mxu0 0.0
          %352 = vmatprep.subr.mxu0 0.0
          %353 = vmatpush1.xpose.msra.mxu0 0.0
          %354 = vmatprep.subr.mxu0 0.0
          %355 = vmatpush1.xpose.msra.mxu0 %v328
          %356 = vmatprep.subr.mxu0 0.0
          %357 = vmatpush1.xpose.msra.mxu0 %v325
          %358 = vmatprep.subr.mxu0 0.0
          %359 = vmatpush1.xpose.msra.mxu0 %v322
          %360 = vmatprep.subr.mxu0 0.0
          %361 = vmatpush1.xpose.msra.mxu0 %v319
          %362 = vmatprep.subr.mxu0 0.0
          %363 = vmatpush2.xpose.msra.mxu0 0.0
          %364 = vmatprep.subr.mxu0 0.0
          %365 = vmatpush2.xpose.msra.mxu0 0.0
          %366 = vmatprep.subr.mxu0 0.0
          %367 = vmatpush2.xpose.msra.mxu0 0.0
          %368 = vmatprep.subr.mxu0 0.0
          %369 = vmatpush2.xpose.msra.mxu0 0.0
          %370 = vmatprep.subr.mxu0 0.0
          %371 = vmatpush2.xpose.msra.mxu0 0.0
          %372 = vmatprep.subr.mxu0 0.0
          %373 = vmatpush2.xpose.msra.mxu0 0.0
          %374 = vmatprep.subr.mxu0 0.0
          %375 = vmatpush2.xpose.msra.mxu0 0.0
          %376 = vmatprep.subr.mxu0 0.0
          %377 = vmatpush2.xpose.msra.mxu0 0.0
          %378 = vmatprep.subr.mxu0 0.0
          %379 = vmatpush2.xpose.msra.mxu0 0.0
          %380 = vmatprep.subr.mxu0 0.0
          %381 = vmatpush2.xpose.msra.mxu0 0.0
          %382 = vmatprep.subr.mxu0 0.0
          %383 = vmatpush2.xpose.msra.mxu0 0.0
          %384 = vmatprep.subr.mxu0 0.0
          %385 = vmatpush2.xpose.msra.mxu0 0.0
          %386 = vmatprep.subr.mxu0 0.0
          %387 = vmatpush2.xpose.msra.mxu0 0.0
          %388 = vmatprep.subr.mxu0 0.0
          %389 = vmatpush2.xpose.msra.mxu0 0.0
          %390 = vmatprep.subr.mxu0 0.0
          %391 = vmatpush2.xpose.msra.mxu0 0.0
          %392 = vmatprep.subr.mxu0 0.0
          %393 = vmatpush2.xpose.msra.mxu0 0.0
          %394 = vmatprep.mubr.f32.mxu0 0.0
          %395 = vmatmul.mubr.f32.gmra.mxu0 %v271
          %v396 = vpop.f32.mrf.mxu0
          %v397 = vadd.f32 %v267, %v396
          %v398 = vpop.f32.mrf.mxu0
          %399 = vmatprep.mubr.f32.mxu0 0.0
          %400 = vmatmul.mubr.f32.gmra.mxu0 %v274
          %v401 = vpop.f32.mrf.mxu0
          %v402 = vadd.f32 %v267, %v401
          %v403 = vpop.f32.mrf.mxu0
          %404 = vmatprep.mubr.f32.mxu0 0.0
          %405 = vmatmul.mubr.f32.gmra.mxu0 %v277
          %v406 = vpop.f32.mrf.mxu0
          %v407 = vadd.f32 %v267, %v406
          %v408 = vpop.f32.mrf.mxu0
          %409 = vmatprep.mubr.f32.mxu0 0.0
          %410 = vmatmul.mubr.f32.gmra.mxu0 %v280
          %v411 = vpop.f32.mrf.mxu0
          %v412 = vadd.f32 %v267, %v411
          %v413 = vpop.f32.mrf.mxu0
          %414 = vmatprep.mubr.f32.mxu0 0.0
          %415 = vmatmul.mubr.f32.gmra.mxu0 %v283
          %v416 = vpop.f32.mrf.mxu0
          %v417 = vadd.f32 %v267, %v416
          %v418 = vpop.f32.mrf.mxu0
          %419 = vmatprep.mubr.f32.mxu0 0.0
          %420 = vmatmul.mubr.f32.gmra.mxu0 %v286
          %v421 = vpop.f32.mrf.mxu0
          %v422 = vadd.f32 %v267, %v421
          %v423 = vpop.f32.mrf.mxu0
          %424 = vmatprep.mubr.f32.mxu0 0.0
          %425 = vmatmul.mubr.f32.gmra.mxu0 %v289
          %v426 = vpop.f32.mrf.mxu0
          %v427 = vadd.f32 %v267, %v426
          %v428 = vpop.f32.mrf.mxu0
          %429 = vmatprep.mubr.f32.mxu0 0.0
          %430 = vmatmul.mubr.f32.gmra.mxu0 %v292
          %v431 = vpop.f32.mrf.mxu0
          %v432 = vadd.f32 %v267, %v431
          %v433 = vpop.f32.mrf.mxu0
          %434 = vmatprep.mubr.f32.mxu0 0.0
          %435 = vmatmul.mubr.f32.gmra.mxu0 %v295
          %v436 = vpop.f32.mrf.mxu0
          %v437 = vadd.f32 %v267, %v436
          %v438 = vpop.f32.mrf.mxu0
          %439 = vmatprep.mubr.f32.mxu0 0.0
          %440 = vmatmul.mubr.f32.gmra.mxu0 %v298
          %v441 = vpop.f32.mrf.mxu0
          %v442 = vadd.f32 %v267, %v441
          %v443 = vpop.f32.mrf.mxu0
          %444 = vmatprep.mubr.f32.mxu0 0.0
          %445 = vmatmul.mubr.f32.gmra.mxu0 %v301
          %v446 = vpop.f32.mrf.mxu0
          %v447 = vadd.f32 %v267, %v446
          %v448 = vpop.f32.mrf.mxu0
          %449 = vmatprep.mubr.f32.mxu0 0.0
          %450 = vmatmul.mubr.f32.gmra.mxu0 %v304
          %v451 = vpop.f32.mrf.mxu0
          %v452 = vadd.f32 %v267, %v451
          %v453 = vpop.f32.mrf.mxu0
          %454 = vmatprep.mubr.f32.mxu0 0.0
          %455 = vmatmul.mubr.f32.gmra.mxu0 %v307
          %v456 = vpop.f32.mrf.mxu0
          %v457 = vadd.f32 %v267, %v456
          %v458 = vpop.f32.mrf.mxu0
          %459 = vmatprep.mubr.f32.mxu0 0.0
          %460 = vmatmul.mubr.f32.gmra.mxu0 %v310
          %v461 = vpop.f32.mrf.mxu0
          %v462 = vadd.f32 %v267, %v461
          %v463 = vpop.f32.mrf.mxu0
          %464 = vmatprep.mubr.f32.mxu0 0.0
          %465 = vmatmul.mubr.f32.gmra.mxu0 %v313
          %v466 = vpop.f32.mrf.mxu0
          %v467 = vadd.f32 %v267, %v466
          %v468 = vpop.f32.mrf.mxu0
          %469 = vmatprep.mubr.f32.mxu0 0.0
          %470 = vmatmul.mubr.f32.gmra.mxu0 %v316
          %v471 = vpop.f32.mrf.mxu0
          %v472 = vadd.f32 %v267, %v471
          %v473 = vpop.f32.mrf.mxu0
          %474 = vdwg.mxu0
          %475 = vst.msk [vmem:[#allocation2] sm:$0xff] %vm269, %v397
          %476 = vst.msk [vmem:[#allocation2 + $0x8] sm:$0xff] %vm269, %v402
          %477 = vst.msk [vmem:[#allocation2 + $0x10] sm:$0xff] %vm269, %v407
          %478 = vst.msk [vmem:[#allocation2 + $0x18] sm:$0xff] %vm269, %v412
          %479 = vst.msk [vmem:[#allocation2 + $0x20] sm:$0xff] %vm269, %v417
          %480 = vst.msk [vmem:[#allocation2 + $0x28] sm:$0xff] %vm269, %v422
          %481 = vst.msk [vmem:[#allocation2 + $0x30] sm:$0xff] %vm269, %v427
          %482 = vst.msk [vmem:[#allocation2 + $0x38] sm:$0xff] %vm269, %v432
          %483 = vst.msk [vmem:[#allocation2 + $0x40] sm:$0xff] %vm269, %v437
          %484 = vst.msk [vmem:[#allocation2 + $0x48] sm:$0xff] %vm269, %v442
          %485 = vst.msk [vmem:[#allocation2 + $0x50] sm:$0xff] %vm269, %v447
          %486 = vst.msk [vmem:[#allocation2 + $0x58] sm:$0xff] %vm269, %v452
          %487 = vst.msk [vmem:[#allocation2 + $0x60] sm:$0xff] %vm269, %v457
          %488 = vst.msk [vmem:[#allocation2 + $0x68] sm:$0xff] %vm269, %v462
          %489 = vst.msk [vmem:[#allocation2 + $0x70] sm:$0xff] %vm269, %v467
          %490 = vst.msk [vmem:[#allocation2 + $0x78] sm:$0xff] %vm269, %v472
        $region44: #{tpu_custom_call.1} parent=39 // pred_fallthru
          _
        %s491 = smul.u32 %s24, 128
        %s492 = scalar_lea.vmem %s236, %s491
        %v493 = vld [vmem:[%s492] sm:$0xff]
        %v494 = vld [vmem:[%s492 + $0x8] sm:$0xff]
        %v495 = vld [vmem:[%s492 + $0x10] sm:$0xff]
        %v496 = vld [vmem:[%s492 + $0x18] sm:$0xff]
        %v497 = vld [vmem:[%s492 + $0x20] sm:$0xff]
        %v498 = vld [vmem:[%s492 + $0x28] sm:$0xff]
        %v499 = vld [vmem:[%s492 + $0x30] sm:$0xff]
        %v500 = vld [vmem:[%s492 + $0x38] sm:$0xff]
        %v501 = vld [vmem:[%s492 + $0x40] sm:$0xff]
        %v502 = vld [vmem:[%s492 + $0x48] sm:$0xff]
        %v503 = vld [vmem:[%s492 + $0x50] sm:$0xff]
        %v504 = vld [vmem:[%s492 + $0x58] sm:$0xff]
        %v505 = vld [vmem:[%s492 + $0x60] sm:$0xff]
        %v506 = vld [vmem:[%s492 + $0x68] sm:$0xff]
        %v507 = vld [vmem:[%s492 + $0x70] sm:$0xff]
        %v508 = vld [vmem:[%s492 + $0x78] sm:$0xff]
        %v509 = vld [vmem:[%s1] sm:$0xff]
        %v510 = vld [vmem:[%s1 + $0x8] sm:$0xff]
        %v511 = vld [vmem:[%s1 + $0x10] sm:$0xff]
        %v512 = vld [vmem:[%s1 + $0x18] sm:$0xff]
        %v513 = vld [vmem:[%s2] sm:$0x1]
        %v515 = vlaneseq
        %v516 = vshrl.u32 %v515, 7
        %v517 = vsub.s32 0, %v516
        %v518 = vrot.slane %v513, %v517
        %vm520 = vcmask 261120
        %v522 = vsel %vm520, %v493, 0
        %v525 = vsel %vm520, %v494, 0
        %v528 = vsel %vm520, %v495, 0
        %v531 = vsel %vm520, %v496, 0
        %v534 = vsel %vm520, %v497, 0
        %v537 = vsel %vm520, %v498, 0
        %v540 = vsel %vm520, %v499, 0
        %v543 = vsel %vm520, %v500, 0
        %v546 = vsel %vm520, %v501, 0
        %v549 = vsel %vm520, %v502, 0
        %v552 = vsel %vm520, %v503, 0
        %v555 = vsel %vm520, %v504, 0
        %v558 = vsel %vm520, %v505, 0
        %v561 = vsel %vm520, %v506, 0
        %v564 = vsel %vm520, %v507, 0
        %v567 = vsel %vm520, %v508, 0
        %v570 = vsel %vm520, %v509, 0
        %v573 = vsel %vm520, %v510, 0
        %v576 = vsel %vm520, %v511, 0
        %v579 = vsel %vm520, %v512, 0
        %581 = vmatprep.subr.mxu0 0.0
        %582 = vmatpush1.xpose.msra.mxu0 0.0
        %583 = vmatprep.subr.mxu0 0.0
        %584 = vmatpush1.xpose.msra.mxu0 0.0
        %585 = vmatprep.subr.mxu0 0.0
        %586 = vmatpush1.xpose.msra.mxu0 0.0
        %587 = vmatprep.subr.mxu0 0.0
        %588 = vmatpush1.xpose.msra.mxu0 0.0
        %589 = vmatprep.subr.mxu0 0.0
        %590 = vmatpush1.xpose.msra.mxu0 0.0
        %591 = vmatprep.subr.mxu0 0.0
        %592 = vmatpush1.xpose.msra.mxu0 0.0
        %593 = vmatprep.subr.mxu0 0.0
        %594 = vmatpush1.xpose.msra.mxu0 0.0
        %595 = vmatprep.subr.mxu0 0.0
        %596 = vmatpush1.xpose.msra.mxu0 0.0
        %597 = vmatprep.subr.mxu0 0.0
        %598 = vmatpush1.xpose.msra.mxu0 0.0
        %599 = vmatprep.subr.mxu0 0.0
        %600 = vmatpush1.xpose.msra.mxu0 0.0
        %601 = vmatprep.subr.mxu0 0.0
        %602 = vmatpush1.xpose.msra.mxu0 0.0
        %603 = vmatprep.subr.mxu0 0.0
        %604 = vmatpush1.xpose.msra.mxu0 0.0
        %605 = vmatprep.subr.mxu0 0.0
        %606 = vmatpush1.xpose.msra.mxu0 %v579
        %607 = vmatprep.subr.mxu0 0.0
        %608 = vmatpush1.xpose.msra.mxu0 %v576
        %609 = vmatprep.subr.mxu0 0.0
        %610 = vmatpush1.xpose.msra.mxu0 %v573
        %611 = vmatprep.subr.mxu0 0.0
        %612 = vmatpush1.xpose.msra.mxu0 %v570
        %613 = vmatprep.subr.mxu0 0.0
        %614 = vmatpush2.xpose.msra.mxu0 0.0
        %615 = vmatprep.subr.mxu0 0.0
        %616 = vmatpush2.xpose.msra.mxu0 0.0
        %617 = vmatprep.subr.mxu0 0.0
        %618 = vmatpush2.xpose.msra.mxu0 0.0
        %619 = vmatprep.subr.mxu0 0.0
        %620 = vmatpush2.xpose.msra.mxu0 0.0
        %621 = vmatprep.subr.mxu0 0.0
        %622 = vmatpush2.xpose.msra.mxu0 0.0
        %623 = vmatprep.subr.mxu0 0.0
        %624 = vmatpush2.xpose.msra.mxu0 0.0
        %625 = vmatprep.subr.mxu0 0.0
        %626 = vmatpush2.xpose.msra.mxu0 0.0
        %627 = vmatprep.subr.mxu0 0.0
        %628 = vmatpush2.xpose.msra.mxu0 0.0
        %629 = vmatprep.subr.mxu0 0.0
        %630 = vmatpush2.xpose.msra.mxu0 0.0
        %631 = vmatprep.subr.mxu0 0.0
        %632 = vmatpush2.xpose.msra.mxu0 0.0
        %633 = vmatprep.subr.mxu0 0.0
        %634 = vmatpush2.xpose.msra.mxu0 0.0
        %635 = vmatprep.subr.mxu0 0.0
        %636 = vmatpush2.xpose.msra.mxu0 0.0
        %637 = vmatprep.subr.mxu0 0.0
        %638 = vmatpush2.xpose.msra.mxu0 0.0
        %639 = vmatprep.subr.mxu0 0.0
        %640 = vmatpush2.xpose.msra.mxu0 0.0
        %641 = vmatprep.subr.mxu0 0.0
        %642 = vmatpush2.xpose.msra.mxu0 0.0
        %643 = vmatprep.subr.mxu0 0.0
        %644 = vmatpush2.xpose.msra.mxu0 0.0
        %645 = vmatprep.mubr.f32.mxu0 0.0
        %646 = vmatmul.mubr.f32.gmra.mxu0 %v522
        %v647 = vpop.f32.mrf.mxu0
        %v648 = vadd.f32 %v518, %v647
        %v649 = vpop.f32.mrf.mxu0
        %650 = vmatprep.mubr.f32.mxu0 0.0
        %651 = vmatmul.mubr.f32.gmra.mxu0 %v525
        %v652 = vpop.f32.mrf.mxu0
        %v653 = vadd.f32 %v518, %v652
        %v654 = vpop.f32.mrf.mxu0
        %655 = vmatprep.mubr.f32.mxu0 0.0
        %656 = vmatmul.mubr.f32.gmra.mxu0 %v528
        %v657 = vpop.f32.mrf.mxu0
        %v658 = vadd.f32 %v518, %v657
        %v659 = vpop.f32.mrf.mxu0
        %660 = vmatprep.mubr.f32.mxu0 0.0
        %661 = vmatmul.mubr.f32.gmra.mxu0 %v531
        %v662 = vpop.f32.mrf.mxu0
        %v663 = vadd.f32 %v518, %v662
        %v664 = vpop.f32.mrf.mxu0
        %665 = vmatprep.mubr.f32.mxu0 0.0
        %666 = vmatmul.mubr.f32.gmra.mxu0 %v534
        %v667 = vpop.f32.mrf.mxu0
        %v668 = vadd.f32 %v518, %v667
        %v669 = vpop.f32.mrf.mxu0
        %670 = vmatprep.mubr.f32.mxu0 0.0
        %671 = vmatmul.mubr.f32.gmra.mxu0 %v537
        %v672 = vpop.f32.mrf.mxu0
        %v673 = vadd.f32 %v518, %v672
        %v674 = vpop.f32.mrf.mxu0
        %675 = vmatprep.mubr.f32.mxu0 0.0
        %676 = vmatmul.mubr.f32.gmra.mxu0 %v540
        %v677 = vpop.f32.mrf.mxu0
        %v678 = vadd.f32 %v518, %v677
        %v679 = vpop.f32.mrf.mxu0
        %680 = vmatprep.mubr.f32.mxu0 0.0
        %681 = vmatmul.mubr.f32.gmra.mxu0 %v543
        %v682 = vpop.f32.mrf.mxu0
        %v683 = vadd.f32 %v518, %v682
        %v684 = vpop.f32.mrf.mxu0
        %685 = vmatprep.mubr.f32.mxu0 0.0
        %686 = vmatmul.mubr.f32.gmra.mxu0 %v546
        %v687 = vpop.f32.mrf.mxu0
        %v688 = vadd.f32 %v518, %v687
        %v689 = vpop.f32.mrf.mxu0
        %690 = vmatprep.mubr.f32.mxu0 0.0
        %691 = vmatmul.mubr.f32.gmra.mxu0 %v549
        %v692 = vpop.f32.mrf.mxu0
        %v693 = vadd.f32 %v518, %v692
        %v694 = vpop.f32.mrf.mxu0
        %695 = vmatprep.mubr.f32.mxu0 0.0
        %696 = vmatmul.mubr.f32.gmra.mxu0 %v552
        %v697 = vpop.f32.mrf.mxu0
        %v698 = vadd.f32 %v518, %v697
        %v699 = vpop.f32.mrf.mxu0
        %700 = vmatprep.mubr.f32.mxu0 0.0
        %701 = vmatmul.mubr.f32.gmra.mxu0 %v555
        %v702 = vpop.f32.mrf.mxu0
        %v703 = vadd.f32 %v518, %v702
        %v704 = vpop.f32.mrf.mxu0
        %705 = vmatprep.mubr.f32.mxu0 0.0
        %706 = vmatmul.mubr.f32.gmra.mxu0 %v558
        %v707 = vpop.f32.mrf.mxu0
        %v708 = vadd.f32 %v518, %v707
        %v709 = vpop.f32.mrf.mxu0
        %710 = vmatprep.mubr.f32.mxu0 0.0
        %711 = vmatmul.mubr.f32.gmra.mxu0 %v561
        %v712 = vpop.f32.mrf.mxu0
        %v713 = vadd.f32 %v518, %v712
        %v714 = vpop.f32.mrf.mxu0
        %715 = vmatprep.mubr.f32.mxu0 0.0
        %716 = vmatmul.mubr.f32.gmra.mxu0 %v564
        %v717 = vpop.f32.mrf.mxu0
        %v718 = vadd.f32 %v518, %v717
        %v719 = vpop.f32.mrf.mxu0
        %720 = vmatprep.mubr.f32.mxu0 0.0
        %721 = vmatmul.mubr.f32.gmra.mxu0 %v567
        %v722 = vpop.f32.mrf.mxu0
        %v723 = vadd.f32 %v518, %v722
        %v724 = vpop.f32.mrf.mxu0
        %725 = vdwg.mxu0
        %v726 = vld [vmem:[#allocation2] sm:$0xff]
        %v727 = vld [vmem:[#allocation2 + $0x8] sm:$0xff]
        %v728 = vld [vmem:[#allocation2 + $0x10] sm:$0xff]
        %v729 = vld [vmem:[#allocation2 + $0x18] sm:$0xff]
        %v730 = vld [vmem:[#allocation2 + $0x20] sm:$0xff]
        %v731 = vld [vmem:[#allocation2 + $0x28] sm:$0xff]
        %v732 = vld [vmem:[#allocation2 + $0x30] sm:$0xff]
        %v733 = vld [vmem:[#allocation2 + $0x38] sm:$0xff]
        %v734 = vld [vmem:[#allocation2 + $0x40] sm:$0xff]
        %v735 = vld [vmem:[#allocation2 + $0x48] sm:$0xff]
        %v736 = vld [vmem:[#allocation2 + $0x50] sm:$0xff]
        %v737 = vld [vmem:[#allocation2 + $0x58] sm:$0xff]
        %v738 = vld [vmem:[#allocation2 + $0x60] sm:$0xff]
        %v739 = vld [vmem:[#allocation2 + $0x68] sm:$0xff]
        %v740 = vld [vmem:[#allocation2 + $0x70] sm:$0xff]
        %v741 = vld [vmem:[#allocation2 + $0x78] sm:$0xff]
        %v743 = vsel %vm520, %v648, 0
        %v746 = vsel %vm520, %v653, 0
        %v749 = vsel %vm520, %v658, 0
        %v752 = vsel %vm520, %v663, 0
        %v755 = vsel %vm520, %v668, 0
        %v758 = vsel %vm520, %v673, 0
        %v761 = vsel %vm520, %v678, 0
        %v764 = vsel %vm520, %v683, 0
        %v767 = vsel %vm520, %v688, 0
        %v770 = vsel %vm520, %v693, 0
        %v773 = vsel %vm520, %v698, 0
        %v776 = vsel %vm520, %v703, 0
        %v779 = vsel %vm520, %v708, 0
        %v782 = vsel %vm520, %v713, 0
        %v785 = vsel %vm520, %v718, 0
        %v788 = vsel %vm520, %v723, 0
        %v791 = vsel %vm520, %v726, 0
        %v794 = vsel %vm520, %v727, 0
        %v797 = vsel %vm520, %v728, 0
        %v800 = vsel %vm520, %v729, 0
        %v803 = vsel %vm520, %v730, 0
        %v806 = vsel %vm520, %v731, 0
        %v809 = vsel %vm520, %v732, 0
        %v812 = vsel %vm520, %v733, 0
        %v815 = vsel %vm520, %v734, 0
        %v818 = vsel %vm520, %v735, 0
        %v821 = vsel %vm520, %v736, 0
        %v824 = vsel %vm520, %v737, 0
        %v827 = vsel %vm520, %v738, 0
        %v830 = vsel %vm520, %v739, 0
        %v833 = vsel %vm520, %v740, 0
        %v836 = vsel %vm520, %v741, 0
        %838 = vmatprep.subr.mxu0 0.0
        %839 = vmatpush1.xpose.msra.mxu0 %v836
        %840 = vmatprep.subr.mxu0 0.0
        %841 = vmatpush1.xpose.msra.mxu0 %v833
        %842 = vmatprep.subr.mxu0 0.0
        %843 = vmatpush1.xpose.msra.mxu0 %v830
        %844 = vmatprep.subr.mxu0 0.0
        %845 = vmatpush1.xpose.msra.mxu0 %v827
        %846 = vmatprep.subr.mxu0 0.0
        %847 = vmatpush1.xpose.msra.mxu0 %v824
        %848 = vmatprep.subr.mxu0 0.0
        %849 = vmatpush1.xpose.msra.mxu0 %v821
        %850 = vmatprep.subr.mxu0 0.0
        %851 = vmatpush1.xpose.msra.mxu0 %v818
        %852 = vmatprep.subr.mxu0 0.0
        %853 = vmatpush1.xpose.msra.mxu0 %v815
        %854 = vmatprep.subr.mxu0 0.0
        %855 = vmatpush1.xpose.msra.mxu0 %v812
        %856 = vmatprep.subr.mxu0 0.0
        %857 = vmatpush1.xpose.msra.mxu0 %v809
        %858 = vmatprep.subr.mxu0 0.0
        %859 = vmatpush1.xpose.msra.mxu0 %v806
        %860 = vmatprep.subr.mxu0 0.0
        %861 = vmatpush1.xpose.msra.mxu0 %v803
        %862 = vmatprep.subr.mxu0 0.0
        %863 = vmatpush1.xpose.msra.mxu0 %v800
        %864 = vmatprep.subr.mxu0 0.0
        %865 = vmatpush1.xpose.msra.mxu0 %v797
        %866 = vmatprep.subr.mxu0 0.0
        %867 = vmatpush1.xpose.msra.mxu0 %v794
        %868 = vmatprep.subr.mxu0 0.0
        %869 = vmatpush1.xpose.msra.mxu0 %v791
        %870 = vmatprep.subr.mxu0 0.0
        %871 = vmatpush2.xpose.msra.mxu0 0.0
        %872 = vmatprep.subr.mxu0 0.0
        %873 = vmatpush2.xpose.msra.mxu0 0.0
        %874 = vmatprep.subr.mxu0 0.0
        %875 = vmatpush2.xpose.msra.mxu0 0.0
        %876 = vmatprep.subr.mxu0 0.0
        %877 = vmatpush2.xpose.msra.mxu0 0.0
        %878 = vmatprep.subr.mxu0 0.0
        %879 = vmatpush2.xpose.msra.mxu0 0.0
        %880 = vmatprep.subr.mxu0 0.0
        %881 = vmatpush2.xpose.msra.mxu0 0.0
        %882 = vmatprep.subr.mxu0 0.0
        %883 = vmatpush2.xpose.msra.mxu0 0.0
        %884 = vmatprep.subr.mxu0 0.0
        %885 = vmatpush2.xpose.msra.mxu0 0.0
        %886 = vmatprep.subr.mxu0 0.0
        %887 = vmatpush2.xpose.msra.mxu0 0.0
        %888 = vmatprep.subr.mxu0 0.0
        %889 = vmatpush2.xpose.msra.mxu0 0.0
        %890 = vmatprep.subr.mxu0 0.0
        %891 = vmatpush2.xpose.msra.mxu0 0.0
        %892 = vmatprep.subr.mxu0 0.0
        %893 = vmatpush2.xpose.msra.mxu0 0.0
        %894 = vmatprep.subr.mxu0 0.0
        %895 = vmatpush2.xpose.msra.mxu0 0.0
        %896 = vmatprep.subr.mxu0 0.0
        %897 = vmatpush2.xpose.msra.mxu0 0.0
        %898 = vmatprep.subr.mxu0 0.0
        %899 = vmatpush2.xpose.msra.mxu0 0.0
        %900 = vmatprep.subr.mxu0 0.0
        %901 = vmatpush2.xpose.msra.mxu0 0.0
        %902 = vmatprep.mubr.f32.mxu0 0.0
        %903 = vmatmul.mubr.f32.gmra.mxu0 %v743
        %v904 = vpop.f32.mrf.mxu0
        %v905 = vadd.f32 0.0, %v904
        %v906 = vpop.f32.mrf.mxu0
        %907 = vmatprep.mubr.f32.mxu0 0.0
        %908 = vmatmul.mubr.f32.gmra.mxu0 %v746
        %v909 = vpop.f32.mrf.mxu0
        %v910 = vadd.f32 0.0, %v909
        %v911 = vpop.f32.mrf.mxu0
        %912 = vmatprep.mubr.f32.mxu0 0.0
        %913 = vmatmul.mubr.f32.gmra.mxu0 %v749
        %v914 = vpop.f32.mrf.mxu0
        %v915 = vadd.f32 0.0, %v914
        %v916 = vpop.f32.mrf.mxu0
        %917 = vmatprep.mubr.f32.mxu0 0.0
        %918 = vmatmul.mubr.f32.gmra.mxu0 %v752
        %v919 = vpop.f32.mrf.mxu0
        %v920 = vadd.f32 0.0, %v919
        %v921 = vpop.f32.mrf.mxu0
        %922 = vmatprep.mubr.f32.mxu0 0.0
        %923 = vmatmul.mubr.f32.gmra.mxu0 %v755
        %v924 = vpop.f32.mrf.mxu0
        %v925 = vadd.f32 0.0, %v924
        %v926 = vpop.f32.mrf.mxu0
        %927 = vmatprep.mubr.f32.mxu0 0.0
        %928 = vmatmul.mubr.f32.gmra.mxu0 %v758
        %v929 = vpop.f32.mrf.mxu0
        %v930 = vadd.f32 0.0, %v929
        %v931 = vpop.f32.mrf.mxu0
        %932 = vmatprep.mubr.f32.mxu0 0.0
        %933 = vmatmul.mubr.f32.gmra.mxu0 %v761
        %v934 = vpop.f32.mrf.mxu0
        %v935 = vadd.f32 0.0, %v934
        %v936 = vpop.f32.mrf.mxu0
        %937 = vmatprep.mubr.f32.mxu0 0.0
        %938 = vmatmul.mubr.f32.gmra.mxu0 %v764
        %v939 = vpop.f32.mrf.mxu0
        %v940 = vadd.f32 0.0, %v939
        %v941 = vpop.f32.mrf.mxu0
        %942 = vmatprep.mubr.f32.mxu0 0.0
        %943 = vmatmul.mubr.f32.gmra.mxu0 %v767
        %v944 = vpop.f32.mrf.mxu0
        %v945 = vadd.f32 0.0, %v944
        %v946 = vpop.f32.mrf.mxu0
        %947 = vmatprep.mubr.f32.mxu0 0.0
        %948 = vmatmul.mubr.f32.gmra.mxu0 %v770
        %v949 = vpop.f32.mrf.mxu0
        %v950 = vadd.f32 0.0, %v949
        %v951 = vpop.f32.mrf.mxu0
        %952 = vmatprep.mubr.f32.mxu0 0.0
        %953 = vmatmul.mubr.f32.gmra.mxu0 %v773
        %v954 = vpop.f32.mrf.mxu0
        %v955 = vadd.f32 0.0, %v954
        %v956 = vpop.f32.mrf.mxu0
        %957 = vmatprep.mubr.f32.mxu0 0.0
        %958 = vmatmul.mubr.f32.gmra.mxu0 %v776
        %v959 = vpop.f32.mrf.mxu0
        %v960 = vadd.f32 0.0, %v959
        %v961 = vpop.f32.mrf.mxu0
        %962 = vmatprep.mubr.f32.mxu0 0.0
        %963 = vmatmul.mubr.f32.gmra.mxu0 %v779
        %v964 = vpop.f32.mrf.mxu0
        %v965 = vadd.f32 0.0, %v964
        %v966 = vpop.f32.mrf.mxu0
        %967 = vmatprep.mubr.f32.mxu0 0.0
        %968 = vmatmul.mubr.f32.gmra.mxu0 %v782
        %v969 = vpop.f32.mrf.mxu0
        %v970 = vadd.f32 0.0, %v969
        %v971 = vpop.f32.mrf.mxu0
        %972 = vmatprep.mubr.f32.mxu0 0.0
        %973 = vmatmul.mubr.f32.gmra.mxu0 %v785
        %v974 = vpop.f32.mrf.mxu0
        %v975 = vadd.f32 0.0, %v974
        %v976 = vpop.f32.mrf.mxu0
        %977 = vmatprep.mubr.f32.mxu0 0.0
        %978 = vmatmul.mubr.f32.gmra.mxu0 %v788
        %v979 = vpop.f32.mrf.mxu0
        %v980 = vadd.f32 0.0, %v979
        %v981 = vpop.f32.mrf.mxu0
        %982 = vdwg.mxu0
        %983 = vst [vmem:[%s231] sm:$0xff] %v905
        %984 = vst [vmem:[%s231 + $0x8] sm:$0xff] %v910
        %985 = vst [vmem:[%s231 + $0x10] sm:$0xff] %v915
        %986 = vst [vmem:[%s231 + $0x18] sm:$0xff] %v920
        %987 = vst [vmem:[%s231 + $0x20] sm:$0xff] %v925
        %988 = vst [vmem:[%s231 + $0x28] sm:$0xff] %v930
        %989 = vst [vmem:[%s231 + $0x30] sm:$0xff] %v935
        %990 = vst [vmem:[%s231 + $0x38] sm:$0xff] %v940
        %991 = vst [vmem:[%s231 + $0x40] sm:$0xff] %v945
        %992 = vst [vmem:[%s231 + $0x48] sm:$0xff] %v950
        %993 = vst [vmem:[%s231 + $0x50] sm:$0xff] %v955
        %994 = vst [vmem:[%s231 + $0x58] sm:$0xff] %v960
        %995 = vst [vmem:[%s231 + $0x60] sm:$0xff] %v965
        %996 = vst [vmem:[%s231 + $0x68] sm:$0xff] %v970
        %997 = vst [vmem:[%s231 + $0x70] sm:$0xff] %v975
        %998 = vst [vmem:[%s231 + $0x78] sm:$0xff] %v980
        %s999 = sand.u32 %s151, 1
        %s1000 = scalar_lea.sflag [#allocation4], %s999
        %s1001 = sand.u32 %s151, 1
        %s1002 = smul.addr %s1001, 128
        %s1003 = scalar_lea.vmem [#allocation3], %s1002
        // Predicated region
        $region45: #{tpu_custom_call.1} parent=39 // pred_check
          %p1004 = pneg %p161
        $region46: #{tpu_custom_call.1} parent=39 // pred_check_branch
          %1006 = sbr.rel (%p1004) target = $region48
        $region47: #{tpu_custom_call.1} parent=39 // pred_region
          %s1007 = smul.u32 16, %s24
          %s1009 = ssub.s32 2048, 2048
          %1010 = vsyncadd %s1000, %s1009
          %s1011 = smul.addr %s23, 16
          %s1012 = sadd.s32 %s1007, %s1011
          %s1013 = smul.addr %s1012, 128
          %s1014 = scalar_lea.hbm %s5, %s1013
          %s1015 = sshll.u32 %s1003, 4
          %s1016 = int_to_ptr.vmem [resolvable:$true] %s1015
          %1021 = dma.vmem_to_hbm [thread:$0]  %s1016, 2048, %s1014, %s1000, 128, 128, 8
        $region48: #{tpu_custom_call.1} parent=39 // pred_fallthru
          _
      $region40: #{tpu_custom_call.1} parent=5 // pred_fallthru
        _
      %p1022 = scmp.le.s32.totalorder 2, %s14
      // Predicated region
      $region49: #{tpu_custom_call.1} parent=5 // pred_check
        %p1023 = pneg %p1022
      $region50: #{tpu_custom_call.1} parent=5 // pred_check_branch
        %1025 = sbr.rel (%p1023) target = $region52
      $region51: #{tpu_custom_call.1} parent=5 // pred_region
        %s1026 = ssub.s32 %s14, 2
        // Predicated region
        $region53: #{tpu_custom_call.1} parent=51 // pred_check
          %p1027 = pneg %p167
        $region54: #{tpu_custom_call.1} parent=51 // pred_check_branch
          %1029 = sbr.rel (%p1027) target = $region56
        $region55: #{tpu_custom_call.1} parent=51 // pred_region
          %s1030 = sand.u32 %s152, 1
          %s1031 = scalar_lea.sflag [#allocation4], %s1030
          %s1032 = sand.u32 %s152, 1
          %s1033 = smul.addr %s1032, 128
          %s1034 = scalar_lea.vmem [#allocation3], %s1033
          %1035 = dma.done %s1031, 2048
        $region56: #{tpu_custom_call.1} parent=51 // pred_fallthru
          _
      $region52: #{tpu_custom_call.1} parent=5 // pred_fallthru
        _
    $region6: #{tpu_custom_call.1} parent=1 // loop_footer
      %s18 = sadd.s32 1, %s14
    $region7: #{tpu_custom_call.1} parent=1 // loop_footer_branch
      %13 = sbr.rel target = $region3
    $region8: #{tpu_custom_call.1} parent=1 // loop_exit
      _
    %1036 = vsyncpa [#allocation4], 1
    %s1037 = scalar_lea.sflag [#allocation4], 1
    %1038 = vsyncpa %s1037, 1

</llo_original>
